<compile_context>
chip_gen: v7x
topology: tpu7x:2x2x1
jax: 0.10.0
libtpu: 0.0.40
codegen_flags: <defaults>
</compile_context>

<pallas_src>
import functools

import jax
import jax.numpy as jnp
from jax.experimental import pallas as pl
from jax.experimental.pallas import tpu as pltpu

_MIB = 1024 * 1024


def _round_up(x, m):
    return ((x + m - 1) // m) * m


def _device_config():
    """Returns (tm, ti, min_token_tiles, vmem_capacity_bytes) per generation."""
    kind = ""
    try:
        kind = jax.devices()[0].device_kind.lower()
    except Exception:
        pass
    vmem_cap = None
    try:
        vmem_cap = int(pltpu.get_tpu_info().vmem_capacity_bytes)
    except Exception:
        vmem_cap = None

    if "v6" in kind:
        # v6e: ~918 TF/s / ~1.4 TB/s ridge -> tall token tiles; 128 MiB VMEM.
        tm, ti, min_tiles, default_cap = 1024, 512, 1, 128 * _MIB
    elif "v5p" in kind:
        tm, ti, min_tiles, default_cap = 512, 512, 2, 128 * _MIB
    elif "v5" in kind:
        # v5e: ridge ~240 FLOP/byte -> tm=256 already balanced; leave alone.
        tm, ti, min_tiles, default_cap = 256, 512, 1, 128 * _MIB
    elif "v4" in kind:
        tm, ti, min_tiles, default_cap = 256, 512, 2, 128 * _MIB
    elif "7" in kind:
        # v7x: ridge ~620 FLOP/byte but only 64 MiB VMEM per TC, 2 TCs/chip.
        tm, ti, min_tiles, default_cap = 640, 256, 2, 64 * _MIB
    else:
        # Unknown: conservative tiles that fit a 64 MiB VMEM part.
        tm, ti, min_tiles, default_cap = 512, 256, 2, 64 * _MIB

    if vmem_cap is None:
        vmem_cap = default_cap
    return tm, ti, min_tiles, vmem_cap


def _est_vmem_bytes(tm, ti, H, cb, ob):
    """Rough VMEM working-set estimate for the chosen tiles."""
    return (2 * tm * H * cb            # x token tile (double buffered)
            + 2 * H * (2 * ti) * cb    # fused gate|up weight tile (dbl buf)
            + 2 * ti * H * cb          # down_proj weight tile (dbl buf)
            + 2 * tm * H * ob          # output tile (dbl buf)
            + tm * H * 4               # f32 accumulator scratch
            + 4 * tm * ti * 4)         # in-flight f32 gate/up/hidden temps


def _mlp_kernel(x_ref, wgu_ref, wd_ref, o_ref, acc_ref, *, ti):
    """One (token-tile, intermediate-tile) step of the SwiGLU MLP.

    x_ref  : (tm, H)      bf16 token tile (reused across the k axis)
    wgu_ref: (H, 2*ti)    fused [gate | up] weight k-tile (pre-transposed bf16)
    wd_ref : (ti, H)      down_proj weight k-tile (pre-transposed bf16)
    o_ref  : (tm, H)      output tile (written once, at the last k step)
    acc_ref: (tm, H)      f32 VMEM accumulator for the down-projection
    """
    k = pl.program_id(1)

    @pl.when(k == 0)
    def _():
        acc_ref[...] = jnp.zeros_like(acc_ref)

    x = x_ref[...]
    # Fused gate+up projection: one MXU launch, one weight DMA stream.
    gu = jnp.dot(x, wgu_ref[...], preferred_element_type=jnp.float32)
    gate = gu[:, :ti]
    up = gu[:, ti:]
    # SiLU(gate) * up in f32 (VPU + EUP).
    hidden = (gate * jax.nn.sigmoid(gate)) * up
    # Partial down-projection for this intermediate tile; accumulate in f32.
    acc_ref[...] += jnp.dot(hidden.astype(wd_ref.dtype), wd_ref[...],
                            preferred_element_type=jnp.float32)

    @pl.when(k == pl.num_programs(1) - 1)
    def _():
        o_ref[...] = acc_ref[...].astype(o_ref.dtype)


def mlp_forward(x, wg_t, wu_t, wd_t, *, tm=None, ti=None,
                compute_dtype=jnp.bfloat16):
    """SwiGLU MLP forward.

    x     : [B, S, H] (or [T, H]) activations.
    w*_t  : pre-transposed [in, out] weights
            (gate: [H, I], up: [H, I], down: [I, H]).
    tm/ti : token-tile height / intermediate tile; default is picked per
            TPU generation (see _device_config).
    """
    orig_shape = x.shape
    H = orig_shape[-1]
    x2d = x.reshape(-1, H)
    T = x2d.shape[0]
    I = wg_t.shape[1]
    out_dtype = x.dtype

    auto_tm, auto_ti, min_token_tiles, vmem_cap = _device_config()
    if tm is None:
        tm = auto_tm
    if ti is None:
        ti = auto_ti

    cb = jnp.dtype(compute_dtype).itemsize
    ob = jnp.dtype(out_dtype).itemsize

    # ---- token-tile sizing (bf16 sublane pack = 16 rows)
    tm = _round_up(min(tm, _round_up(T, 16)), 16)
    T_pad = _round_up(T, tm)
    # Give each TensorCore at least one token tile on 2-TC parts (v7x).
    while T_pad // tm < min_token_tiles and tm > 16:
        new_tm = _round_up(max(16, tm // 2), 16)
        if new_tm == tm:
            break
        tm = new_tm
        T_pad = _round_up(T, tm)

    # ---- intermediate-tile sizing (lane-aligned weight tiles)
    if ti >= I:
        ti = I
    else:
        ti = max(128, (ti // 128) * 128)

    # ---- shrink tiles until the double-buffered working set fits VMEM
    vmem_budget = min(100 * _MIB, vmem_cap - 8 * _MIB)
    while (_est_vmem_bytes(tm, ti, H, cb, ob) * 5 // 4 > vmem_budget
           and (tm > 256 or ti > 128)):
        if tm > 256:
            tm = _round_up(max(256, tm // 2), 16)
        else:
            ti = max(128, (ti // 2) // 128 * 128)
    T_pad = _round_up(T, tm)
    I_pad = _round_up(I, ti)

    n_t_tiles = T_pad // tm
    n_i_tiles = I_pad // ti

    # ---- cast to bf16 for the MXU and zero-pad ragged dims
    xc = x2d.astype(compute_dtype)
    wgc = wg_t.astype(compute_dtype)
    wuc = wu_t.astype(compute_dtype)
    wdc = wd_t.astype(compute_dtype)
    if T_pad != T:
        xc = jnp.pad(xc, ((0, T_pad - T), (0, 0)))
    if I_pad != I:
        wgc = jnp.pad(wgc, ((0, 0), (0, I_pad - I)))
        wuc = jnp.pad(wuc, ((0, 0), (0, I_pad - I)))
        wdc = jnp.pad(wdc, ((0, I_pad - I), (0, 0)))

    # Fuse gate/up weights tile-wise: for block k, columns [0, ti) are the
    # k-th gate tile and [ti, 2*ti) are the k-th up tile.
    wguc = jnp.concatenate(
        [wgc.reshape(H, n_i_tiles, ti), wuc.reshape(H, n_i_tiles, ti)],
        axis=2).reshape(H, 2 * I_pad)

    # ---- VMEM limit clamped to the device's physical capacity (v7x: 64 MiB)
    est = _est_vmem_bytes(tm, ti, H, cb, ob)
    vmem_limit = int(min(max(est * 5 // 4, 32 * _MIB), vmem_budget))

    # ---- advisory cost estimate so XLA can overlap the custom call
    cost = pl.CostEstimate(
        flops=int(6 * T_pad * H * I_pad),
        transcendentals=int(T_pad * I_pad),
        bytes_accessed=int(n_t_tiles * 3 * H * I_pad * cb
                           + T_pad * H * (cb + ob)),
    )

    kernel = functools.partial(_mlp_kernel, ti=ti)
    out = pl.pallas_call(
        kernel,
        out_shape=jax.ShapeDtypeStruct((T_pad, H), out_dtype),
        grid_spec=pltpu.PrefetchScalarGridSpec(
            num_scalar_prefetch=0,
            grid=(n_t_tiles, n_i_tiles),
            in_specs=[
                pl.BlockSpec((tm, H), lambda i, k: (i, 0)),      # x token tile
                pl.BlockSpec((H, 2 * ti), lambda i, k: (0, k)),  # gate|up tile
                pl.BlockSpec((ti, H), lambda i, k: (k, 0)),      # down tile
            ],
            out_specs=pl.BlockSpec((tm, H), lambda i, k: (i, 0)),
            scratch_shapes=[pltpu.VMEM((tm, H), jnp.float32)],
        ),
        compiler_params=pltpu.CompilerParams(
            dimension_semantics=("parallel", "arbitrary"),
            vmem_limit_bytes=vmem_limit),
        cost_estimate=cost,
    )(xc, wguc, wdc)

    if T_pad != T:
        out = out[:T]
    return out.reshape(orig_shape)


def _init_linear_weight(key, out_features, in_features, dtype=jnp.float32):
    # PyTorch nn.Linear-like uniform(-1/sqrt(in), 1/sqrt(in)) init.
    bound = 1.0 / jnp.sqrt(jnp.float32(in_features))
    return jax.random.uniform(key, (out_features, in_features),
                              dtype=dtype, minval=-bound, maxval=bound)


if __name__ == "__main__":
    # Small config consistent with the module's forward (mlp_bias=False).
    batch, seq = 2, 8
    hidden_size = 32
    intermediate_size = 64

    key = jax.random.PRNGKey(0)
    kx, kg, ku, kd = jax.random.split(key, 4)

    x = jax.random.normal(kx, (batch, seq, hidden_size), dtype=jnp.float32)

    # nn.Linear weights are (out_features, in_features); pre-transpose to
    # (in, out) for the kernel's row-major MXU matmuls.
    wg = _init_linear_weight(kg, intermediate_size, hidden_size)   # gate_proj
    wu = _init_linear_weight(ku, intermediate_size, hidden_size)   # up_proj
    wd = _init_linear_weight(kd, hidden_size, intermediate_size)   # down_proj

    out = mlp_forward(x, wg.T, wu.T, wd.T)
    out = jax.block_until_ready(out)
    assert out.shape == x.shape

    # Pure-JAX reference with the same bf16 input/weight casting the kernel
    # uses (f32 accumulation), so tolerances stay tight.
    f32 = jnp.float32
    xb = x.astype(jnp.bfloat16).astype(f32)
    wgb = wg.astype(jnp.bfloat16).astype(f32)
    wub = wu.astype(jnp.bfloat16).astype(f32)
    wdb = wd.astype(jnp.bfloat16).astype(f32)
    gate_ref = xb @ wgb.T
    up_ref = xb @ wub.T
    hidden_ref = (jax.nn.silu(gate_ref) * up_ref)
    hidden_ref = hidden_ref.astype(jnp.bfloat16).astype(f32)
    ref = hidden_ref @ wdb.T

    assert jnp.allclose(out.astype(f32), ref, atol=2e-2, rtol=2e-2), (
        float(jnp.max(jnp.abs(out.astype(f32) - ref))))

    print("KERNEL_OK")
</pallas_src>

<mosaic_0001>
module attributes {stable_mosaic.version = 11 : i64} {
  func.func @_mlp_kernel(%arg0: i32, %arg1: i32, %arg2: memref<16x32xbf16, #tpu.memory_space<vmem>>, %arg3: memref<32x128xbf16, #tpu.memory_space<vmem>>, %arg4: memref<64x32xbf16, #tpu.memory_space<vmem>>, %arg5: memref<16x32xf32, #tpu.memory_space<vmem>>, %arg6: memref<16x32xf32, #tpu.memory_space<vmem>>) attributes {dimension_semantics = [#tpu.dimension_semantics<parallel>, #tpu.dimension_semantics<arbitrary>], iteration_bounds = array<i64: 1, 1>, scalar_prefetch = 0 : i64, scratch_operands = 1 : i64, tpu.core_type = #tpu.core_type<tc>, window_params = [{transform_indices = @transform_0, window_bounds = array<i64: 16, 32>}, {transform_indices = @transform_1, window_bounds = array<i64: 32, 128>}, {transform_indices = @transform_2, window_bounds = array<i64: 64, 32>}, {transform_indices = @transform_3, window_bounds = array<i64: 16, 32>}]} {
    %c0_i32 = arith.constant 0 : i32
    %0 = arith.cmpi eq, %arg1, %c0_i32 : i32
    %1 = arith.extui %0 : i1 to i32
    %c0_i32_0 = arith.constant 0 : i32
    %2 = arith.cmpi ne, %1, %c0_i32_0 : i32
    scf.if %2 {
      %cst_14 = arith.constant 0.000000e+00 : f32
      %24 = vector.broadcast %cst_14 : f32 to vector<16x32xf32>
      %c0_15 = arith.constant 0 : index
      %c0_16 = arith.constant 0 : index
      %25 = vector.load %arg6[%c0_15, %c0_16] : memref<16x32xf32, #tpu.memory_space<vmem>>, vector<16x32xf32>
      tpu.vector_store %arg6[%c0_15, %c0_16], %24 {strides = array<i32>} : memref<16x32xf32, #tpu.memory_space<vmem>>, vector<16x32xf32>,
    } else {
    }
    %c0 = arith.constant 0 : index
    %c0_1 = arith.constant 0 : index
    %3 = vector.load %arg2[%c0, %c0_1] : memref<16x32xbf16, #tpu.memory_space<vmem>>, vector<16x32xbf16>
    %c0_2 = arith.constant 0 : index
    %c0_3 = arith.constant 0 : index
    %4 = vector.load %arg3[%c0_2, %c0_3] : memref<32x128xbf16, #tpu.memory_space<vmem>>, vector<32x128xbf16>
    %cst = arith.constant dense<0.000000e+00> : vector<16x128xf32>
    %5 = tpu.matmul %3, %4, %cst {dimension_numbers = #tpu.dot_dimension_numbers<[1], [0], [0], [1], [0, 0, 1, 1], [], []>} : vector<16x32xbf16>, vector<32x128xbf16>, vector<16x128xf32> -> vector<16x128xf32>
    %6 = vector.extract_strided_slice %5 {offsets = [0, 0], sizes = [16, 64], strides = [1, 1]} : vector<16x128xf32> to vector<16x64xf32>
    %7 = vector.extract_strided_slice %5 {offsets = [0, 64], sizes = [16, 64], strides = [1, 1]} : vector<16x128xf32> to vector<16x64xf32>
    %8 = arith.negf %6 : vector<16x64xf32>
    %9 = math.exp %8 : vector<16x64xf32>
    %cst_4 = arith.constant 1.000000e+00 : f32
    %10 = vector.broadcast %cst_4 : f32 to vector<16x64xf32>
    %11 = arith.addf %10, %9 : vector<16x64xf32>
    %12 = arith.divf %10, %11 : vector<16x64xf32>
    %13 = arith.mulf %6, %12 : vector<16x64xf32>
    %14 = arith.mulf %13, %7 : vector<16x64xf32>
    %c0_5 = arith.constant 0 : index
    %c0_6 = arith.constant 0 : index
    %15 = vector.load %arg6[%c0_5, %c0_6] : memref<16x32xf32, #tpu.memory_space<vmem>>, vector<16x32xf32>
    %16 = arith.truncf %14 : vector<16x64xf32> to vector<16x64xbf16>
    %c0_7 = arith.constant 0 : index
    %c0_8 = arith.constant 0 : index
    %17 = vector.load %arg4[%c0_7, %c0_8] : memref<64x32xbf16, #tpu.memory_space<vmem>>, vector<64x32xbf16>
    %cst_9 = arith.constant dense<0.000000e+00> : vector<16x32xf32>
    %18 = tpu.matmul %16, %17, %cst_9 {dimension_numbers = #tpu.dot_dimension_numbers<[1], [0], [0], [1], [0, 0, 1, 1], [], []>} : vector<16x64xbf16>, vector<64x32xbf16>, vector<16x32xf32> -> vector<16x32xf32>
    %19 = arith.addf %15, %18 : vector<16x32xf32>
    %c0_10 = arith.constant 0 : index
    %c0_11 = arith.constant 0 : index
    %20 = vector.load %arg6[%c0_10, %c0_11] : memref<16x32xf32, #tpu.memory_space<vmem>>, vector<16x32xf32>
    tpu.vector_store %arg6[%c0_10, %c0_11], %19 {strides = array<i32>} : memref<16x32xf32, #tpu.memory_space<vmem>>, vector<16x32xf32>,
    %c0_i32_12 = arith.constant 0 : i32
    %21 = arith.cmpi eq, %arg1, %c0_i32_12 : i32
    %22 = arith.extui %21 : i1 to i32
    %c0_i32_13 = arith.constant 0 : i32
    %23 = arith.cmpi ne, %22, %c0_i32_13 : i32
    scf.if %23 {
      %c0_14 = arith.constant 0 : index
      %c0_15 = arith.constant 0 : index
      %24 = vector.load %arg6[%c0_14, %c0_15] : memref<16x32xf32, #tpu.memory_space<vmem>>, vector<16x32xf32>
      %c0_16 = arith.constant 0 : index
      %c0_17 = arith.constant 0 : index
      %25 = vector.load %arg5[%c0_16, %c0_17] : memref<16x32xf32, #tpu.memory_space<vmem>>, vector<16x32xf32>
      tpu.vector_store %arg5[%c0_16, %c0_17], %24 {strides = array<i32>} : memref<16x32xf32, #tpu.memory_space<vmem>>, vector<16x32xf32>,
    } else {
    }
    return
  }
  func.func @transform_0(%arg0: i32, %arg1: i32) -> (i32, i32) {
    %c0_i32 = arith.constant 0 : i32
    %c0_i32_0 = arith.constant 0 : i32
    return %arg0, %c0_i32 : i32, i32
  }
  func.func @transform_1(%arg0: i32, %arg1: i32) -> (i32, i32) {
    %c0_i32 = arith.constant 0 : i32
    %c0_i32_0 = arith.constant 0 : i32
    return %c0_i32, %arg1 : i32, i32
  }
  func.func @transform_2(%arg0: i32, %arg1: i32) -> (i32, i32) {
    %c0_i32 = arith.constant 0 : i32
    %c0_i32_0 = arith.constant 0 : i32
    return %arg1, %c0_i32 : i32, i32
  }
  func.func @transform_3(%arg0: i32, %arg1: i32) -> (i32, i32) {
    %c0_i32 = arith.constant 0 : i32
    %c0_i32_0 = arith.constant 0 : i32
    return %arg0, %c0_i32 : i32, i32
  }
}

</mosaic_0001>

<llo_original>
// kernel: tpu_custom_call.1
$region0: #{tpu_custom_call.1}
  #allocation0 [shape = 'u32[]', space=smem, size = 0x4, offset = 0x4, fixed_abs, tag = 'smem constant byte address 0x4 - core index']
  #allocation1 [shape = 'u32[144,128]{1,0:T(1,128)}', space=vmem, size = 0x12000, scoped, tag = 'internal scratch']
  #allocation2 [shape = 'f32[16,32]{1,0:T(8,128)}', space=vmem, size = 0x2000, scoped, tag = 'scratch operand']
  %s0 = inlined_call_operand.vmem [shape: bf16[16,32], index: 0, kind: input, shape index: {}]
  %s1 = inlined_call_operand.vmem [shape: bf16[32,128], index: 1, kind: input, shape index: {}]
  %s2 = inlined_call_operand.vmem [shape: bf16[64,32], index: 2, kind: input, shape index: {}]
  %s3 = inlined_call_operand.hbm [shape: f32[16,32], index: 3, kind: output, shape index: {}]
  %s4 = sld [smem:[#allocation0]]
  $region30: #{tpu_custom_call.1} parent=0
    _
  %s6 = ssub.s32 1, %s4
  %s7 = scalar_select 0, %s6, %s4
  $region1: #{tpu_custom_call.1} parent=0
    #allocation3 [shape = 'u8[8192]{0}', space=vmem, size = 0x2000, scoped, tag = 'output window, operand 0, single buffered']
    #allocation4 [shape = 's32[1]{0}', space=sflag, size = 0x4, scoped, tag = 'scoped memory for tpu_custom_call.1']
    %8 = vsyncpa [#allocation4], 0
    // Predicated region
    $region2: #{tpu_custom_call.1} parent=1 // pred_check
      _
    $region3: #{tpu_custom_call.1} parent=1 // pred_check_branch
      %10 = sbr.rel (0) target = $region5
    $region4: #{tpu_custom_call.1} parent=1 // pred_region
      _
    $region5: #{tpu_custom_call.1} parent=1 // pred_fallthru
      _
    // Predicated region
    $region6: #{tpu_custom_call.1} parent=1 // pred_check
      _
    $region7: #{tpu_custom_call.1} parent=1 // pred_check_branch
      %12 = sbr.rel (0) target = $region9
    $region8: #{tpu_custom_call.1} parent=1 // pred_region
      _
    $region9: #{tpu_custom_call.1} parent=1 // pred_fallthru
      _
    // Predicated region
    $region10: #{tpu_custom_call.1} parent=1 // pred_check
      _
    $region11: #{tpu_custom_call.1} parent=1 // pred_check_branch
      %14 = sbr.rel (0) target = $region13
    $region12: #{tpu_custom_call.1} parent=1 // pred_region
      _
    $region13: #{tpu_custom_call.1} parent=1 // pred_fallthru
      _
    %p16 = scmp.eq.s32.totalorder 0, 0
    // Predicated region
    $region14: #{tpu_custom_call.1} parent=1 // pred_check
      %p17 = pneg %p16
    $region15: #{tpu_custom_call.1} parent=1 // pred_check_branch
      %19 = sbr.rel (%p17) target = $region17
    $region16: #{tpu_custom_call.1} parent=1 // pred_region
      %vm20 = vcmask 261120
      %21 = vst.msk [vmem:[#allocation2] sm:$0xff] %vm20, 0.0
      %22 = vst.msk [vmem:[#allocation2 + $0x8] sm:$0xff] %vm20, 0.0
    $region17: #{tpu_custom_call.1} parent=1 // pred_fallthru
      _
    %v23 = vld [vmem:[%s0] sm:$0xf]
    %v24 = vld [vmem:[%s0 + $0x4] sm:$0xf]
    %v25 = vld [vmem:[%s1] sm:$0xf]
    %v26 = vld [vmem:[%s1 + $0x4] sm:$0xf]
    %v27 = vld [vmem:[%s1 + $0x8] sm:$0xf]
    %v28 = vld [vmem:[%s1 + $0xc] sm:$0xf]
    %v31 = vunpack.c.l.b16 %v23
    %v32 = vunpack.c.l.b16 %v24
    %v33 = vpack.c.b16 %v32, %v31
    %v38 = vunpack.c.l.b16 %v25
    %v39 = vunpack.c.l.b16 %v26
    %v40 = vunpack.c.l.b16 %v27
    %v41 = vunpack.c.l.b16 %v28
    %v42 = vpack.c.b16 %v39, %v38
    %v43 = vpack.c.b16 %v41, %v40
    %vm46 = vcmask 261120
    %v48 = vsel %vm46, %v33, 0
    %50 = vmatprep.subr.bf16.mxu0 0
    %51 = vmatpush1.bf16.msra.mxu0 %v42
    %52 = vmatprep.subr.bf16.mxu0 0
    %53 = vmatpush1.bf16.msra.mxu0 %v43
    %54 = vmatprep.subr.bf16.mxu0 0
    %55 = vmatpush1.bf16.msra.mxu0 0
    %56 = vmatprep.subr.bf16.mxu0 0
    %57 = vmatpush1.bf16.msra.mxu0 0
    %58 = vmatprep.subr.bf16.mxu0 0
    %59 = vmatpush1.bf16.msra.mxu0 0
    %60 = vmatprep.subr.bf16.mxu0 0
    %61 = vmatpush1.bf16.msra.mxu0 0
    %62 = vmatprep.subr.bf16.mxu0 0
    %63 = vmatpush1.bf16.msra.mxu0 0
    %64 = vmatprep.subr.bf16.mxu0 0
    %65 = vmatpush1.bf16.msra.mxu0 0
    %66 = vmatprep.subr.bf16.mxu0 0
    %67 = vmatpush1.bf16.msra.mxu0 0
    %68 = vmatprep.subr.bf16.mxu0 0
    %69 = vmatpush1.bf16.msra.mxu0 0
    %70 = vmatprep.subr.bf16.mxu0 0
    %71 = vmatpush1.bf16.msra.mxu0 0
    %72 = vmatprep.subr.bf16.mxu0 0
    %73 = vmatpush1.bf16.msra.mxu0 0
    %74 = vmatprep.subr.bf16.mxu0 0
    %75 = vmatpush1.bf16.msra.mxu0 0
    %76 = vmatprep.subr.bf16.mxu0 0
    %77 = vmatpush1.bf16.msra.mxu0 0
    %78 = vmatprep.subr.bf16.mxu0 0
    %79 = vmatpush1.bf16.msra.mxu0 0
    %80 = vmatprep.subr.bf16.mxu0 0
    %81 = vmatpush1.bf16.msra.mxu0 0
    %82 = vmatprep.mubr.bf16.mxu0 0
    %83 = vmatmul.mubr.bf16.gmra.mrb[0].mxu0 %v48
    %v84 = vpop.f32.mrb[0].mxu0
    %v85 = vadd.f32 0.0, %v84
    %v86 = vpop.f32.mrb[0].mxu0
    %v87 = vpop.f32.mrb[0].mxu0
    %v88 = vadd.f32 0.0, %v87
    %v89 = vpop.f32.mrb[0].mxu0
    %90 = vdwg.mxu0
    %v91 = vxor.u32 %v85, 2147483648
    %v92 = vxor.u32 %v88, 2147483648
    %v93 = vmul.f32 %v91, 1.442695
    %v94 = vpow.pop %v93
    %v95 = vmul.f32 %v92, 1.442695
    %v96 = vpow.pop %v95
    %v97 = vadd.f32 %v94, 1.0
    %v98 = vadd.f32 %v96, 1.0
    %v99 = vrcp.pop %v97
    %v100 = vmul.f32 1.0, %v99
    %v101 = vrcp.pop %v98
    %v102 = vmul.f32 1.0, %v101
    %v103 = vmul.f32 %v85, %v100
    %v104 = vmul.f32 %v88, %v102
    %107 = vrot.lane.b32.xlu0 %v85, 64
    %v108 = vpop.permute.xlu0 %107
    %109 = vrot.lane.b32.xlu0 %v88, 64
    %v110 = vpop.permute.xlu0 %109
    %v113 = vmul.f32 %v103, %v108
    %v114 = vmul.f32 %v104, %v110
    %v115 = vld [vmem:[#allocation2] sm:$0xff]
    %v116 = vld [vmem:[#allocation2 + $0x8] sm:$0xff]
    %v117 = vpack.c.bf16 %v114, %v113
    %v118 = vld [vmem:[%s2] sm:$0xf]
    %v119 = vld [vmem:[%s2 + $0x4] sm:$0xf]
    %v120 = vld [vmem:[%s2 + $0x8] sm:$0xf]
    %v121 = vld [vmem:[%s2 + $0xc] sm:$0xf]
    %v122 = vld [vmem:[%s2 + $0x10] sm:$0xf]
    %v123 = vld [vmem:[%s2 + $0x14] sm:$0xf]
    %v124 = vld [vmem:[%s2 + $0x18] sm:$0xf]
    %v125 = vld [vmem:[%s2 + $0x1c] sm:$0xf]
    %v134 = vunpack.c.l.b16 %v118
    %v135 = vunpack.c.l.b16 %v119
    %v136 = vunpack.c.l.b16 %v120
    %v137 = vunpack.c.l.b16 %v121
    %v138 = vunpack.c.l.b16 %v122
    %v139 = vunpack.c.l.b16 %v123
    %v140 = vunpack.c.l.b16 %v124
    %v141 = vunpack.c.l.b16 %v125
    %v142 = vpack.c.b16 %v135, %v134
    %v143 = vpack.c.b16 %v137, %v136
    %v144 = vpack.c.b16 %v139, %v138
    %v145 = vpack.c.b16 %v141, %v140
    %vm150 = vcmask 523264
    %v152 = vsel %vm150, %v117, 0
    %154 = vmatprep.subr.bf16.mxu0 0
    %155 = vmatpush1.bf16.msra.mxu0 %v142
    %156 = vmatprep.subr.bf16.mxu0 0
    %157 = vmatpush1.bf16.msra.mxu0 %v143
    %158 = vmatprep.subr.bf16.mxu0 0
    %159 = vmatpush1.bf16.msra.mxu0 %v144
    %160 = vmatprep.subr.bf16.mxu0 0
    %161 = vmatpush1.bf16.msra.mxu0 %v145
    %162 = vmatprep.subr.bf16.mxu0 0
    %163 = vmatpush1.bf16.msra.mxu0 0
    %164 = vmatprep.subr.bf16.mxu0 0
    %165 = vmatpush1.bf16.msra.mxu0 0
    %166 = vmatprep.subr.bf16.mxu0 0
    %167 = vmatpush1.bf16.msra.mxu0 0
    %168 = vmatprep.subr.bf16.mxu0 0
    %169 = vmatpush1.bf16.msra.mxu0 0
    %170 = vmatprep.subr.bf16.mxu0 0
    %171 = vmatpush1.bf16.msra.mxu0 0
    %172 = vmatprep.subr.bf16.mxu0 0
    %173 = vmatpush1.bf16.msra.mxu0 0
    %174 = vmatprep.subr.bf16.mxu0 0
    %175 = vmatpush1.bf16.msra.mxu0 0
    %176 = vmatprep.subr.bf16.mxu0 0
    %177 = vmatpush1.bf16.msra.mxu0 0
    %178 = vmatprep.subr.bf16.mxu0 0
    %179 = vmatpush1.bf16.msra.mxu0 0
    %180 = vmatprep.subr.bf16.mxu0 0
    %181 = vmatpush1.bf16.msra.mxu0 0
    %182 = vmatprep.subr.bf16.mxu0 0
    %183 = vmatpush1.bf16.msra.mxu0 0
    %184 = vmatprep.subr.bf16.mxu0 0
    %185 = vmatpush1.bf16.msra.mxu0 0
    %186 = vmatprep.mubr.bf16.mxu0 0
    %187 = vmatmul.mubr.bf16.gmra.mrb[0].mxu0 %v152
    %v188 = vpop.f32.mrb[0].mxu0
    %v189 = vadd.f32 0.0, %v188
    %v190 = vpop.f32.mrb[0].mxu0
    %v191 = vpop.f32.mrb[0].mxu0
    %v192 = vadd.f32 0.0, %v191
    %v193 = vpop.f32.mrb[0].mxu0
    %194 = vdwg.mxu0
    %v195 = vadd.f32 %v115, %v189
    %v196 = vadd.f32 %v116, %v192
    %197 = vst.msk [vmem:[#allocation2] sm:$0xff] %vm46, %v195
    %198 = vst.msk [vmem:[#allocation2 + $0x8] sm:$0xff] %vm46, %v196
    // Predicated region
    $region18: #{tpu_custom_call.1} parent=1 // pred_check
      %p199 = pneg %p16
    $region19: #{tpu_custom_call.1} parent=1 // pred_check_branch
      %201 = sbr.rel (%p199) target = $region21
    $region20: #{tpu_custom_call.1} parent=1 // pred_region
      %v202 = vld [vmem:[#allocation2] sm:$0xff]
      %v203 = vld [vmem:[#allocation2 + $0x8] sm:$0xff]
      %204 = vst.msk [vmem:[#allocation3] sm:$0xff] %vm46, %v202
      %205 = vst.msk [vmem:[#allocation3 + $0x8] sm:$0xff] %vm46, %v203
    $region21: #{tpu_custom_call.1} parent=1 // pred_fallthru
      _
    // Predicated region
    $region22: #{tpu_custom_call.1} parent=1 // pred_check
      _
    $region23: #{tpu_custom_call.1} parent=1 // pred_check_branch
      %207 = sbr.rel (0) target = $region25
    $region24: #{tpu_custom_call.1} parent=1 // pred_region
      %s209 = ssub.s32 256, 256
      %210 = vsyncadd [#allocation4], %s209
      %s211 = sshll.u32 [#allocation3], 4
      %s212 = int_to_ptr.vmem [resolvable:$true] %s211
      %217 = dma.vmem_to_hbm [thread:$0]  %s212, 256, %s3, [#allocation4], 128, 128, 8
    $region25: #{tpu_custom_call.1} parent=1 // pred_fallthru
      _
    // Predicated region
    $region26: #{tpu_custom_call.1} parent=1 // pred_check
      _
    $region27: #{tpu_custom_call.1} parent=1 // pred_check_branch
      %219 = sbr.rel (0) target = $region29
    $region28: #{tpu_custom_call.1} parent=1 // pred_region
      %220 = dma.done [#allocation4], 256
    $region29: #{tpu_custom_call.1} parent=1 // pred_fallthru
      _
    %221 = vsyncpa [#allocation4], 1

</llo_original>
